<compile_context>
chip_gen: v5e
topology: v5e:2x2
jax: 0.10.0
libtpu: 0.0.40
codegen_flags: <defaults>
</compile_context>

<pallas_src>
import functools
import math

import jax
import jax.numpy as jnp
from jax.experimental import pallas as pl
from jax.experimental.pallas import tpu as pltpu

LANE = 128
BATCH_ALIGN = 16      # bf16 sublane packing: batch tiles in multiples of 16


def _round_up(n, m):
    return (n + m - 1) // m * m


# ----------------------------------------------------------------------------
# Kernel: fused trunk (Linear+ReLU)* + merged-head Linear + Sigmoid
# ----------------------------------------------------------------------------
def _fc_kernel(x_ref, w0_ref, b0_ref, tw_ref, tb_ref, hw_ref, hb_ref, out_ref,
               *, num_inner):
    """
    x_ref  : (TB, IN_PAD)                      bf16 input tile (zero-padded lanes)
    w0_ref : (IN_PAD, H_PAD)                   bf16 first trunk layer weight
    b0_ref : (1, H_PAD)                        f32
    tw_ref : (max(num_inner,1), H_PAD, H_PAD)  bf16 interior trunk weights
    tb_ref : (max(num_inner,1), 1, H_PAD)      f32
    hw_ref : (H_PAD, HOUT_PAD)                 bf16 concatenated head weights
    hb_ref : (1, HOUT_PAD)                     f32
    out_ref: (TB, HOUT_PAD)                    f32 concatenated head outputs
    """
    # Layer 0: input width padded separately from hidden width.
    h = jnp.dot(x_ref[...], w0_ref[...],
                preferred_element_type=jnp.float32) + b0_ref[...]
    h = jnp.maximum(h, 0.0)

    # Interior trunk layers (num_inner is a Python constant -> unrolled).
    # Elementwise math stays f32 (portable to v5e: no bf16 VPU path there).
    for l in range(num_inner):
        h = jnp.dot(h.astype(jnp.bfloat16), tw_ref[l],
                    preferred_element_type=jnp.float32) + tb_ref[l]
        h = jnp.maximum(h, 0.0)

    # All 5 heads fused into one MXU dot + sigmoid + one lane-dense store.
    y = jnp.dot(h.astype(jnp.bfloat16), hw_ref[...],
                preferred_element_type=jnp.float32) + hb_ref[...]
    e = jnp.exp(-y)                                        # EUP
    out_ref[...] = pl.reciprocal(1.0 + e, approx=True).astype(out_ref.dtype)


# ----------------------------------------------------------------------------
# One-time parameter packing (call at init; reuse the result every forward).
# ----------------------------------------------------------------------------
def pack_params(trunk_params, head_params, input_size):
    """trunk_params/head_params: lists of (w(in,out), b(1,out))."""
    f32, bf16 = jnp.float32, jnp.bfloat16
    hidden_size = trunk_params[0][0].shape[1]
    num_inner = len(trunk_params) - 1
    head_dims = tuple(int(w.shape[1]) for w, _ in head_params)

    in_pad = _round_up(input_size, LANE)
    h_pad = _round_up(hidden_size, LANE)
    hout_pad = _round_up(sum(head_dims), LANE)

    w0, b0 = trunk_params[0]
    w0_p = jnp.zeros((in_pad, h_pad), bf16)
    w0_p = w0_p.at[:input_size, :hidden_size].set(w0.astype(bf16))
    b0_p = jnp.zeros((1, h_pad), f32)
    b0_p = b0_p.at[0, :hidden_size].set(b0.reshape(-1).astype(f32))

    n_slab = max(num_inner, 1)            # dummy slab when num_layers == 2
    tw_p = jnp.zeros((n_slab, h_pad, h_pad), bf16)
    tb_p = jnp.zeros((n_slab, 1, h_pad), f32)
    for l, (w, b) in enumerate(trunk_params[1:]):
        tw_p = tw_p.at[l, :hidden_size, :hidden_size].set(w.astype(bf16))
        tb_p = tb_p.at[l, 0, :hidden_size].set(b.reshape(-1).astype(f32))

    hw_p = jnp.zeros((h_pad, hout_pad), bf16)
    hb_p = jnp.zeros((1, hout_pad), f32)
    off = 0
    for w, b in head_params:
        n = w.shape[1]
        hw_p = hw_p.at[:hidden_size, off:off + n].set(w.astype(bf16))
        hb_p = hb_p.at[0, off:off + n].set(b.reshape(-1).astype(f32))
        off += n

    arrays = (w0_p, b0_p, tw_p, tb_p, hw_p, hb_p)
    meta = dict(input_size=int(input_size), num_inner=int(num_inner),
                head_dims=head_dims)
    return arrays, meta


# ----------------------------------------------------------------------------
# Forward: batch-tiled pallas_call on pre-packed params.
# ----------------------------------------------------------------------------
@functools.partial(jax.jit,
                   static_argnames=("input_size", "num_inner", "head_dims"))
def _fc_forward_packed(x, w0_p, b0_p, tw_p, tb_p, hw_p, hb_p, *,
                       input_size, num_inner, head_dims):
    B = x.shape[0]
    in_pad, h_pad = w0_p.shape
    hout_pad = hw_p.shape[1]
    n_slab = tw_p.shape[0]

    # Batch tile: >=2 grid steps for moderate/large batches (both v7x TCs get
    # work); large tiles (<=512 rows) amortize per-step overhead; tiny batches
    # keep a single small tile so padding stays minimal.
    if B < 2 * BATCH_ALIGN:
        tile_b = _round_up(max(B, 1), BATCH_ALIGN)
    else:
        tile_b = min(512, _round_up(pl.cdiv(B, 2), BATCH_ALIGN))
    b_pad = _round_up(B, tile_b)

    # bf16 activations on the wire: halves the dominant activation DMA bytes.
    x_p = jnp.zeros((b_pad, in_pad), jnp.bfloat16)
    x_p = x_p.at[:B, :input_size].set(x.astype(jnp.bfloat16))

    # VMEM estimate: weights single-buffered, x/out double-buffered, + margin.
    wbytes = 2 * (w0_p.size + tw_p.size + hw_p.size) \
        + 4 * (b0_p.size + tb_p.size + hb_p.size)
    abytes = 2 * tile_b * in_pad * 2 + 2 * tile_b * hout_pad * 4
    est = wbytes + abytes + (2 << 20)
    vmem_limit = None
    if est > (30 << 20):
        # TODO(synk): if est ever exceeds ~56 MiB (v7x VMEM), stream trunk
        # weights per layer via a second "arbitrary" grid axis instead of one
        # resident slab.
        vmem_limit = min(int(est * 1.25), 56 << 20)

    resident = dict(pipeline_mode=pl.Buffered(1))  # constant index_map -> 1 buffer

    kernel = functools.partial(_fc_kernel, num_inner=num_inner)

    y = pl.pallas_call(
        kernel,
        out_shape=jax.ShapeDtypeStruct((b_pad, hout_pad), jnp.float32),
        grid=(b_pad // tile_b,),
        in_specs=[
            pl.BlockSpec((tile_b, in_pad), lambda i: (i, 0)),                 # x tile
            pl.BlockSpec((in_pad, h_pad), lambda i: (0, 0), **resident),      # W0
            pl.BlockSpec((1, h_pad), lambda i: (0, 0), **resident),           # b0
            pl.BlockSpec((n_slab, h_pad, h_pad), lambda i: (0, 0, 0), **resident),  # inner W
            pl.BlockSpec((n_slab, 1, h_pad), lambda i: (0, 0, 0), **resident),      # inner b
            pl.BlockSpec((h_pad, hout_pad), lambda i: (0, 0), **resident),    # head W
            pl.BlockSpec((1, hout_pad), lambda i: (0, 0), **resident),        # head b
        ],
        out_specs=pl.BlockSpec((tile_b, hout_pad), lambda i: (i, 0)),
        compiler_params=pltpu.CompilerParams(
            dimension_semantics=("parallel",),     # batch axis -> 2 TCs on v7x
            vmem_limit_bytes=vmem_limit,
        ),
    )(x_p, w0_p, b0_p, tw_p, tb_p, hw_p, hb_p)

    # Strip padding and split the merged slab per head (cheap XLA slices).
    y = y[:B].astype(x.dtype)
    outs, off = [], 0
    for n in head_dims:
        outs.append(y[:, off:off + n])
        off += n
    return tuple(outs)


def fc_network_forward(x, packed):
    arrays, meta = packed
    return _fc_forward_packed(x, *arrays, **meta)


# ----------------------------------------------------------------------------
# Deterministic parameter init (mimics nn.Linear default: U(-1/sqrt(fan_in), +))
# Weights stored transposed vs PyTorch ((in, out)); biases (1, out) f32.
# ----------------------------------------------------------------------------
def _init_linear(key, fan_in, fan_out):
    kw, kb = jax.random.split(key)
    bound = 1.0 / math.sqrt(fan_in)
    w = jax.random.uniform(kw, (fan_in, fan_out), jnp.float32, -bound, bound)
    b = jax.random.uniform(kb, (1, fan_out), jnp.float32, -bound, bound)
    return w, b


def init_params(key, input_size, hidden_size, num_layers, output_size):
    trunk_params, k = [], key
    k, sub = jax.random.split(k)
    trunk_params.append(_init_linear(sub, input_size, hidden_size))
    for _ in range(num_layers - 2):
        k, sub = jax.random.split(k)
        trunk_params.append(_init_linear(sub, hidden_size, hidden_size))
    head_params = []
    for out_dim in output_size:
        k, sub = jax.random.split(k)
        head_params.append(_init_linear(sub, hidden_size, out_dim))
    return trunk_params, head_params


# ----------------------------------------------------------------------------
# Pure-JAX reference (mirrors the kernel's bf16-matmul / f32-accumulate path,
# exact sigmoid).
# ----------------------------------------------------------------------------
def fc_network_ref(x, trunk_params, head_params):
    h = x.astype(jnp.float32)
    for w, b in trunk_params:
        a = h.astype(jnp.bfloat16).astype(jnp.float32)
        wb = w.astype(jnp.bfloat16).astype(jnp.float32)
        h = jnp.maximum(a @ wb + b, 0.0)
    a = h.astype(jnp.bfloat16).astype(jnp.float32)
    outs = []
    for w, b in head_params:
        wb = w.astype(jnp.bfloat16).astype(jnp.float32)
        y = a @ wb + b
        outs.append(jax.nn.sigmoid(y))
    return tuple(outs)


if __name__ == "__main__":
    # Small shapes consistent with the module.
    batch = 2
    input_size = 16
    hidden_size = 32
    num_layers = 3                       # -> 2 trunk Linear+ReLU layers
    output_size = (4, 3, 2, 5, 6)        # 5 heads

    key = jax.random.PRNGKey(0)
    key, kx = jax.random.split(key)
    x = jax.random.normal(kx, (batch, input_size), jnp.float32)

    trunk_params, head_params = init_params(
        key, input_size, hidden_size, num_layers, output_size)

    packed = pack_params(trunk_params, head_params, input_size)  # one-time packing
    outs = fc_network_forward(x, packed)
    outs = jax.block_until_ready(outs)

    refs = fc_network_ref(x, trunk_params, head_params)
    for o, r, od in zip(outs, refs, output_size):
        assert o.shape == (batch, od), (o.shape, od)
        err = float(jnp.max(jnp.abs(o - r)))
        # bf16 matmuls + approx EUP reciprocal in the sigmoid => ~1e-3 tolerance
        assert err < 2e-3, err

    print("KERNEL_OK")
</pallas_src>

<mosaic_0001>
module attributes {stable_mosaic.version = 11 : i64} {
  func.func @_fc_kernel(%arg0: i32, %arg1: memref<16x128xbf16, #tpu.memory_space<vmem>>, %arg2: memref<128x128xbf16, #tpu.memory_space<vmem>>, %arg3: memref<1x128xf32, #tpu.memory_space<vmem>>, %arg4: memref<1x128x128xbf16, #tpu.memory_space<vmem>>, %arg5: memref<1x1x128xf32, #tpu.memory_space<vmem>>, %arg6: memref<128x128xbf16, #tpu.memory_space<vmem>>, %arg7: memref<1x128xf32, #tpu.memory_space<vmem>>, %arg8: memref<16x128xf32, #tpu.memory_space<vmem>>) attributes {dimension_semantics = [#tpu.dimension_semantics<parallel>], iteration_bounds = array<i64: 1>, scalar_prefetch = 0 : i64, scratch_operands = 0 : i64, tpu.core_type = #tpu.core_type<tc>, window_params = [{transform_indices = @transform_0, window_bounds = array<i64: 16, 128>}, {pipeline_mode = #tpu.pipeline_mode<synchronous>, transform_indices = @transform_1, window_bounds = array<i64: 128, 128>}, {pipeline_mode = #tpu.pipeline_mode<synchronous>, transform_indices = @transform_2, window_bounds = array<i64: 1, 128>}, {pipeline_mode = #tpu.pipeline_mode<synchronous>, transform_indices = @transform_3, window_bounds = array<i64: 1, 128, 128>}, {pipeline_mode = #tpu.pipeline_mode<synchronous>, transform_indices = @transform_4, window_bounds = array<i64: 1, 1, 128>}, {pipeline_mode = #tpu.pipeline_mode<synchronous>, transform_indices = @transform_5, window_bounds = array<i64: 128, 128>}, {pipeline_mode = #tpu.pipeline_mode<synchronous>, transform_indices = @transform_6, window_bounds = array<i64: 1, 128>}, {transform_indices = @transform_7, window_bounds = array<i64: 16, 128>}]} {
    %c0 = arith.constant 0 : index
    %c0_0 = arith.constant 0 : index
    %0 = vector.load %arg1[%c0, %c0_0] : memref<16x128xbf16, #tpu.memory_space<vmem>>, vector<16x128xbf16>
    %c0_1 = arith.constant 0 : index
    %c0_2 = arith.constant 0 : index
    %1 = vector.load %arg2[%c0_1, %c0_2] : memref<128x128xbf16, #tpu.memory_space<vmem>>, vector<128x128xbf16>
    %cst = arith.constant dense<0.000000e+00> : vector<16x128xf32>
    %2 = tpu.matmul %0, %1, %cst {dimension_numbers = #tpu.dot_dimension_numbers<[1], [0], [0], [1], [0, 0, 1, 1], [], []>} : vector<16x128xbf16>, vector<128x128xbf16>, vector<16x128xf32> -> vector<16x128xf32>
    %c0_3 = arith.constant 0 : index
    %c0_4 = arith.constant 0 : index
    %3 = vector.load %arg3[%c0_3, %c0_4] : memref<1x128xf32, #tpu.memory_space<vmem>>, vector<1x128xf32>
    %4 = vector.broadcast %3 : vector<1x128xf32> to vector<16x128xf32>
    %5 = arith.addf %2, %4 : vector<16x128xf32>
    %cst_5 = arith.constant 0.000000e+00 : f32
    %6 = vector.broadcast %cst_5 : f32 to vector<16x128xf32>
    %7 = arith.maximumf %5, %6 : vector<16x128xf32>
    %8 = arith.truncf %7 : vector<16x128xf32> to vector<16x128xbf16>
    %c0_6 = arith.constant 0 : index
    %c0_7 = arith.constant 0 : index
    %c0_8 = arith.constant 0 : index
    %9 = vector.load %arg4[%c0_6, %c0_7, %c0_8] : memref<1x128x128xbf16, #tpu.memory_space<vmem>>, vector<1x128x128xbf16>
    %10 = vector.shape_cast %9 : vector<1x128x128xbf16> to vector<128x128xbf16>
    %cst_9 = arith.constant dense<0.000000e+00> : vector<16x128xf32>
    %11 = tpu.matmul %8, %10, %cst_9 {dimension_numbers = #tpu.dot_dimension_numbers<[1], [0], [0], [1], [0, 0, 1, 1], [], []>} : vector<16x128xbf16>, vector<128x128xbf16>, vector<16x128xf32> -> vector<16x128xf32>
    %c0_10 = arith.constant 0 : index
    %c0_11 = arith.constant 0 : index
    %c0_12 = arith.constant 0 : index
    %12 = vector.load %arg5[%c0_10, %c0_11, %c0_12] : memref<1x1x128xf32, #tpu.memory_space<vmem>>, vector<1x1x128xf32>
    %13 = vector.shape_cast %12 : vector<1x1x128xf32> to vector<1x128xf32>
    %14 = vector.broadcast %13 : vector<1x128xf32> to vector<16x128xf32>
    %15 = arith.addf %11, %14 : vector<16x128xf32>
    %cst_13 = arith.constant 0.000000e+00 : f32
    %16 = vector.broadcast %cst_13 : f32 to vector<16x128xf32>
    %17 = arith.maximumf %15, %16 : vector<16x128xf32>
    %18 = arith.truncf %17 : vector<16x128xf32> to vector<16x128xbf16>
    %c0_14 = arith.constant 0 : index
    %c0_15 = arith.constant 0 : index
    %19 = vector.load %arg6[%c0_14, %c0_15] : memref<128x128xbf16, #tpu.memory_space<vmem>>, vector<128x128xbf16>
    %cst_16 = arith.constant dense<0.000000e+00> : vector<16x128xf32>
    %20 = tpu.matmul %18, %19, %cst_16 {dimension_numbers = #tpu.dot_dimension_numbers<[1], [0], [0], [1], [0, 0, 1, 1], [], []>} : vector<16x128xbf16>, vector<128x128xbf16>, vector<16x128xf32> -> vector<16x128xf32>
    %c0_17 = arith.constant 0 : index
    %c0_18 = arith.constant 0 : index
    %21 = vector.load %arg7[%c0_17, %c0_18] : memref<1x128xf32, #tpu.memory_space<vmem>>, vector<1x128xf32>
    %22 = vector.broadcast %21 : vector<1x128xf32> to vector<16x128xf32>
    %23 = arith.addf %20, %22 : vector<16x128xf32>
    %cst_19 = arith.constant 0.000000e+00 : f32
    %24 = vector.broadcast %cst_19 : f32 to vector<16x128xf32>
    %25 = arith.subf %24, %23 : vector<16x128xf32>
    %26 = math.exp %25 : vector<16x128xf32>
    %cst_20 = arith.constant 1.000000e+00 : f32
    %27 = vector.broadcast %cst_20 : f32 to vector<16x128xf32>
    %28 = arith.addf %27, %26 : vector<16x128xf32>
    %29 = tpu.reciprocal %28 {approx = true} : vector<16x128xf32> -> vector<16x128xf32>
    %c0_21 = arith.constant 0 : index
    %c0_22 = arith.constant 0 : index
    %30 = vector.load %arg8[%c0_21, %c0_22] : memref<16x128xf32, #tpu.memory_space<vmem>>, vector<16x128xf32>
    tpu.vector_store %arg8[%c0_21, %c0_22], %29 {strides = array<i32>} : memref<16x128xf32, #tpu.memory_space<vmem>>, vector<16x128xf32>,
    return
  }
  func.func @transform_0(%arg0: i32) -> (i32, i32) {
    %c0_i32 = arith.constant 0 : i32
    %c0_i32_0 = arith.constant 0 : i32
    return %arg0, %c0_i32 : i32, i32
  }
  func.func @transform_1(%arg0: i32) -> (i32, i32) {
    %c0_i32 = arith.constant 0 : i32
    %c0_i32_0 = arith.constant 0 : i32
    %c0_i32_1 = arith.constant 0 : i32
    return %c0_i32, %c0_i32_0 : i32, i32
  }
  func.func @transform_2(%arg0: i32) -> (i32, i32) {
    %c0_i32 = arith.constant 0 : i32
    %c0_i32_0 = arith.constant 0 : i32
    %c0_i32_1 = arith.constant 0 : i32
    return %c0_i32, %c0_i32_0 : i32, i32
  }
  func.func @transform_3(%arg0: i32) -> (i32, i32, i32) {
    %c0_i32 = arith.constant 0 : i32
    %c0_i32_0 = arith.constant 0 : i32
    %c0_i32_1 = arith.constant 0 : i32
    %c0_i32_2 = arith.constant 0 : i32
    return %c0_i32, %c0_i32_0, %c0_i32_1 : i32, i32, i32
  }
  func.func @transform_4(%arg0: i32) -> (i32, i32, i32) {
    %c0_i32 = arith.constant 0 : i32
    %c0_i32_0 = arith.constant 0 : i32
    %c0_i32_1 = arith.constant 0 : i32
    %c0_i32_2 = arith.constant 0 : i32
    return %c0_i32, %c0_i32_0, %c0_i32_1 : i32, i32, i32
  }
  func.func @transform_5(%arg0: i32) -> (i32, i32) {
    %c0_i32 = arith.constant 0 : i32
    %c0_i32_0 = arith.constant 0 : i32
    %c0_i32_1 = arith.constant 0 : i32
    return %c0_i32, %c0_i32_0 : i32, i32
  }
  func.func @transform_6(%arg0: i32) -> (i32, i32) {
    %c0_i32 = arith.constant 0 : i32
    %c0_i32_0 = arith.constant 0 : i32
    %c0_i32_1 = arith.constant 0 : i32
    return %c0_i32, %c0_i32_0 : i32, i32
  }
  func.func @transform_7(%arg0: i32) -> (i32, i32) {
    %c0_i32 = arith.constant 0 : i32
    %c0_i32_0 = arith.constant 0 : i32
    return %arg0, %c0_i32 : i32, i32
  }
}

</mosaic_0001>

<llo_original>
// kernel: _fc_forward_packed.1
$region0: #{_fc_forward_packed.1}
  #allocation0 [shape = 'u32[]', space=smem, size = 0x4, offset = 0x4, fixed_abs, tag = 'smem constant byte address 0x4 - core index']
  #allocation1 [shape = 'u32[72,128]{1,0:T(1,128)}', space=vmem, size = 0x9000, scoped, tag = 'internal scratch']
  %s0 = inlined_call_operand.vmem [shape: bf16[16,128], index: 0, kind: input, shape index: {}]
  %s1 = inlined_call_operand.hbm [shape: bf16[128,128], index: 1, kind: input, shape index: {}]
  %s2 = inlined_call_operand.vmem [shape: f32[1,128], index: 2, kind: input, shape index: {}]
  %s3 = inlined_call_operand.hbm [shape: bf16[1,128,128], index: 3, kind: input, shape index: {}]
  %s4 = inlined_call_operand.vmem [shape: f32[1,1,128], index: 4, kind: input, shape index: {}]
  %s5 = inlined_call_operand.hbm [shape: bf16[128,128], index: 5, kind: input, shape index: {}]
  %s6 = inlined_call_operand.vmem [shape: f32[1,128], index: 6, kind: input, shape index: {}]
  %s7 = inlined_call_operand.vmem [shape: f32[16,128], index: 7, kind: output, shape index: {}]
  %s8 = sld [smem:[#allocation0]]
  $region50: #{_fc_forward_packed.1} parent=0
    _
  %s10 = ssub.s32 1, %s8
  %s11 = scalar_select 0, %s10, %s8
  $region1: #{_fc_forward_packed.1} parent=0
    #allocation2 [shape = 'u8[32768]{0}', space=vmem, size = 0x8000, scoped, tag = 'input window, operand 1, single buffered']
    #allocation3 [shape = 's32[1]{0}', space=sflag, size = 0x4, scoped, tag = 'scoped memory for _fc_forward_packed.1']
    #allocation4 [shape = 'u8[32768]{0}', space=vmem, size = 0x8000, scoped, tag = 'input window, operand 3, single buffered']
    #allocation5 [shape = 's32[1]{0}', space=sflag, size = 0x4, scoped, tag = 'scoped memory for _fc_forward_packed.1']
    #allocation6 [shape = 'u8[32768]{0}', space=vmem, size = 0x8000, scoped, tag = 'input window, operand 5, single buffered']
    %12 = vsyncpa [#allocation3], 0
    %13 = vsyncpa [#allocation5], 0
    // Predicated region
    $region2: #{_fc_forward_packed.1} parent=1 // pred_check
      _
    $region3: #{_fc_forward_packed.1} parent=1 // pred_check_branch
      %15 = sbr.rel (0) target = $region5
    $region4: #{_fc_forward_packed.1} parent=1 // pred_region
      _
    $region5: #{_fc_forward_packed.1} parent=1 // pred_fallthru
      _
    // Predicated region
    $region6: #{_fc_forward_packed.1} parent=1 // pred_check
      _
    $region7: #{_fc_forward_packed.1} parent=1 // pred_check_branch
      %17 = sbr.rel (0) target = $region9
    $region8: #{_fc_forward_packed.1} parent=1 // pred_region
      %19 = vsyncadd [#allocation3], 0
      %s20 = sshll.u32 %s1, 4
      %s21 = int_to_ptr.hbm [resolvable:$true] %s20
      %s22 = sshll.u32 [#allocation2], 4
      %s23 = int_to_ptr.vmem [resolvable:$true] %s22
      %28 = dma.hbm_to_vmem [thread:$0]  %s21, 1024, %s23, [#allocation3], 64, 64, 4
    $region9: #{_fc_forward_packed.1} parent=1 // pred_fallthru
      _
    // Predicated region
    $region10: #{_fc_forward_packed.1} parent=1 // pred_check
      _
    $region11: #{_fc_forward_packed.1} parent=1 // pred_check_branch
      %30 = sbr.rel (0) target = $region13
    $region12: #{_fc_forward_packed.1} parent=1 // pred_region
      _
    $region13: #{_fc_forward_packed.1} parent=1 // pred_fallthru
      _
    // Predicated region
    $region14: #{_fc_forward_packed.1} parent=1 // pred_check
      _
    $region15: #{_fc_forward_packed.1} parent=1 // pred_check_branch
      %32 = sbr.rel (0) target = $region17
    $region16: #{_fc_forward_packed.1} parent=1 // pred_region
      %34 = vsyncadd [#allocation5], 0
      %s35 = sshll.u32 %s3, 4
      %s36 = int_to_ptr.hbm [resolvable:$true] %s35
      %s37 = sshll.u32 [#allocation4], 4
      %s38 = int_to_ptr.vmem [resolvable:$true] %s37
      %43 = dma.hbm_to_vmem [thread:$0]  %s36, 1024, %s38, [#allocation5], 64, 64, 4
    $region17: #{_fc_forward_packed.1} parent=1 // pred_fallthru
      _
    // Predicated region
    $region18: #{_fc_forward_packed.1} parent=1 // pred_check
      _
    $region19: #{_fc_forward_packed.1} parent=1 // pred_check_branch
      %45 = sbr.rel (0) target = $region21
    $region20: #{_fc_forward_packed.1} parent=1 // pred_region
      _
    $region21: #{_fc_forward_packed.1} parent=1 // pred_fallthru
      _
    // Predicated region
    $region22: #{_fc_forward_packed.1} parent=1 // pred_check
      _
    $region23: #{_fc_forward_packed.1} parent=1 // pred_check_branch
      %47 = sbr.rel (0) target = $region25
    $region24: #{_fc_forward_packed.1} parent=1 // pred_region
      %49 = vsyncadd [#allocation5], 0
      %s50 = sshll.u32 %s5, 4
      %s51 = int_to_ptr.hbm [resolvable:$true] %s50
      %s52 = sshll.u32 [#allocation6], 4
      %s53 = int_to_ptr.vmem [resolvable:$true] %s52
      %58 = dma.hbm_to_vmem [thread:$0]  %s51, 1024, %s53, [#allocation5], 64, 64, 4
    $region25: #{_fc_forward_packed.1} parent=1 // pred_fallthru
      _
    // Predicated region
    $region26: #{_fc_forward_packed.1} parent=1 // pred_check
      _
    $region27: #{_fc_forward_packed.1} parent=1 // pred_check_branch
      %60 = sbr.rel (0) target = $region29
    $region28: #{_fc_forward_packed.1} parent=1 // pred_region
      _
    $region29: #{_fc_forward_packed.1} parent=1 // pred_fallthru
      _
    // Predicated region
    $region30: #{_fc_forward_packed.1} parent=1 // pred_check
      _
    $region31: #{_fc_forward_packed.1} parent=1 // pred_check_branch
      %62 = sbr.rel (0) target = $region33
    $region32: #{_fc_forward_packed.1} parent=1 // pred_region
      %64 = dma.done [#allocation3], 1024
    $region33: #{_fc_forward_packed.1} parent=1 // pred_fallthru
      _
    // Predicated region
    $region34: #{_fc_forward_packed.1} parent=1 // pred_check
      _
    $region35: #{_fc_forward_packed.1} parent=1 // pred_check_branch
      %66 = sbr.rel (0) target = $region37
    $region36: #{_fc_forward_packed.1} parent=1 // pred_region
      %68 = dma.done [#allocation5], 1024
    $region37: #{_fc_forward_packed.1} parent=1 // pred_fallthru
      _
    // Predicated region
    $region38: #{_fc_forward_packed.1} parent=1 // pred_check
      _
    $region39: #{_fc_forward_packed.1} parent=1 // pred_check_branch
      %70 = sbr.rel (0) target = $region41
    $region40: #{_fc_forward_packed.1} parent=1 // pred_region
      %72 = dma.done [#allocation5], 1024
    $region41: #{_fc_forward_packed.1} parent=1 // pred_fallthru
      _
    %v73 = vld [vmem:[%s0] sm:$0xf]
    %v74 = vld [vmem:[%s0 + $0x4] sm:$0xf]
    %v75 = vld [vmem:[#allocation2] sm:$0xf]
    %v76 = vld [vmem:[#allocation2 + $0x4] sm:$0xf]
    %v77 = vld [vmem:[#allocation2 + $0x8] sm:$0xf]
    %v78 = vld [vmem:[#allocation2 + $0xc] sm:$0xf]
    %v79 = vld [vmem:[#allocation2 + $0x10] sm:$0xf]
    %v80 = vld [vmem:[#allocation2 + $0x14] sm:$0xf]
    %v81 = vld [vmem:[#allocation2 + $0x18] sm:$0xf]
    %v82 = vld [vmem:[#allocation2 + $0x1c] sm:$0xf]
    %v83 = vld [vmem:[#allocation2 + $0x20] sm:$0xf]
    %v84 = vld [vmem:[#allocation2 + $0x24] sm:$0xf]
    %v85 = vld [vmem:[#allocation2 + $0x28] sm:$0xf]
    %v86 = vld [vmem:[#allocation2 + $0x2c] sm:$0xf]
    %v87 = vld [vmem:[#allocation2 + $0x30] sm:$0xf]
    %v88 = vld [vmem:[#allocation2 + $0x34] sm:$0xf]
    %v89 = vld [vmem:[#allocation2 + $0x38] sm:$0xf]
    %v90 = vld [vmem:[#allocation2 + $0x3c] sm:$0xf]
    %v91 = vld [vmem:[%s2] sm:$0x1]
    %v93 = vperm.slane %v91, 0
    %v97 = vunpack.c.l.b16 %v73
    %v98 = vunpack.c.l.b16 %v74
    %v99 = vpack.c.b16 %v98, %v97
    %v117 = vunpack.c.l.b16 %v75
    %v118 = vunpack.c.l.b16 %v76
    %v119 = vunpack.c.l.b16 %v77
    %v120 = vunpack.c.l.b16 %v78
    %v121 = vunpack.c.l.b16 %v79
    %v122 = vunpack.c.l.b16 %v80
    %v123 = vunpack.c.l.b16 %v81
    %v124 = vunpack.c.l.b16 %v82
    %v125 = vunpack.c.l.b16 %v83
    %v126 = vunpack.c.l.b16 %v84
    %v127 = vunpack.c.l.b16 %v85
    %v128 = vunpack.c.l.b16 %v86
    %v129 = vunpack.c.l.b16 %v87
    %v130 = vunpack.c.l.b16 %v88
    %v131 = vunpack.c.l.b16 %v89
    %v132 = vunpack.c.l.b16 %v90
    %v133 = vpack.c.b16 %v118, %v117
    %v134 = vpack.c.b16 %v120, %v119
    %v135 = vpack.c.b16 %v122, %v121
    %v136 = vpack.c.b16 %v124, %v123
    %v137 = vpack.c.b16 %v126, %v125
    %v138 = vpack.c.b16 %v128, %v127
    %v139 = vpack.c.b16 %v130, %v129
    %v140 = vpack.c.b16 %v132, %v131
    %149 = vmatpush.bf16.msra.mxu0 %v140
    %150 = vmatpush.bf16.msra.mxu0 %v139
    %151 = vmatpush.bf16.msra.mxu0 %v138
    %152 = vmatpush.bf16.msra.mxu0 %v137
    %153 = vmatpush.bf16.msra.mxu0 %v136
    %154 = vmatpush.bf16.msra.mxu0 %v135
    %155 = vmatpush.bf16.msra.mxu0 %v134
    %156 = vmatpush.bf16.msra.mxu0 %v133
    %157 = vmatmul.bf16.gmra.mxu0 %v99
    %v158 = vpop.f32.mrf.mxu0
    %v159 = vadd.f32 %v93, %v158
    %v160 = vpop.f32.mrf.mxu0
    %v161 = vadd.f32 %v93, %v160
    %162 = vdwg.mxu0
    %v163 = vmax.f32 %v159, 0.0
    %v164 = vmax.f32 %v161, 0.0
    %v165 = vpack.c.bf16 %v164, %v163
    %v166 = vld [vmem:[#allocation4] sm:$0xf]
    %v167 = vld [vmem:[#allocation4 + $0x4] sm:$0xf]
    %v168 = vld [vmem:[#allocation4 + $0x8] sm:$0xf]
    %v169 = vld [vmem:[#allocation4 + $0xc] sm:$0xf]
    %v170 = vld [vmem:[#allocation4 + $0x10] sm:$0xf]
    %v171 = vld [vmem:[#allocation4 + $0x14] sm:$0xf]
    %v172 = vld [vmem:[#allocation4 + $0x18] sm:$0xf]
    %v173 = vld [vmem:[#allocation4 + $0x1c] sm:$0xf]
    %v174 = vld [vmem:[#allocation4 + $0x20] sm:$0xf]
    %v175 = vld [vmem:[#allocation4 + $0x24] sm:$0xf]
    %v176 = vld [vmem:[#allocation4 + $0x28] sm:$0xf]
    %v177 = vld [vmem:[#allocation4 + $0x2c] sm:$0xf]
    %v178 = vld [vmem:[#allocation4 + $0x30] sm:$0xf]
    %v179 = vld [vmem:[#allocation4 + $0x34] sm:$0xf]
    %v180 = vld [vmem:[#allocation4 + $0x38] sm:$0xf]
    %v181 = vld [vmem:[#allocation4 + $0x3c] sm:$0xf]
    %v182 = vld [vmem:[%s4] sm:$0x1]
    %v184 = vperm.slane %v182, 0
    %v202 = vunpack.c.l.b16 %v166
    %v203 = vunpack.c.l.b16 %v167
    %v204 = vunpack.c.l.b16 %v168
    %v205 = vunpack.c.l.b16 %v169
    %v206 = vunpack.c.l.b16 %v170
    %v207 = vunpack.c.l.b16 %v171
    %v208 = vunpack.c.l.b16 %v172
    %v209 = vunpack.c.l.b16 %v173
    %v210 = vunpack.c.l.b16 %v174
    %v211 = vunpack.c.l.b16 %v175
    %v212 = vunpack.c.l.b16 %v176
    %v213 = vunpack.c.l.b16 %v177
    %v214 = vunpack.c.l.b16 %v178
    %v215 = vunpack.c.l.b16 %v179
    %v216 = vunpack.c.l.b16 %v180
    %v217 = vunpack.c.l.b16 %v181
    %v218 = vpack.c.b16 %v203, %v202
    %v219 = vpack.c.b16 %v205, %v204
    %v220 = vpack.c.b16 %v207, %v206
    %v221 = vpack.c.b16 %v209, %v208
    %v222 = vpack.c.b16 %v211, %v210
    %v223 = vpack.c.b16 %v213, %v212
    %v224 = vpack.c.b16 %v215, %v214
    %v225 = vpack.c.b16 %v217, %v216
    %234 = vmatpush.bf16.msra.mxu0 %v225
    %235 = vmatpush.bf16.msra.mxu0 %v224
    %236 = vmatpush.bf16.msra.mxu0 %v223
    %237 = vmatpush.bf16.msra.mxu0 %v222
    %238 = vmatpush.bf16.msra.mxu0 %v221
    %239 = vmatpush.bf16.msra.mxu0 %v220
    %240 = vmatpush.bf16.msra.mxu0 %v219
    %241 = vmatpush.bf16.msra.mxu0 %v218
    %242 = vmatmul.bf16.gmra.mxu0 %v165
    %v243 = vpop.f32.mrf.mxu0
    %v244 = vadd.f32 %v184, %v243
    %v245 = vpop.f32.mrf.mxu0
    %v246 = vadd.f32 %v184, %v245
    %247 = vdwg.mxu0
    %v248 = vmax.f32 %v244, 0.0
    %v249 = vmax.f32 %v246, 0.0
    %v250 = vpack.c.bf16 %v249, %v248
    %v251 = vld [vmem:[#allocation6] sm:$0xf]
    %v252 = vld [vmem:[#allocation6 + $0x4] sm:$0xf]
    %v253 = vld [vmem:[#allocation6 + $0x8] sm:$0xf]
    %v254 = vld [vmem:[#allocation6 + $0xc] sm:$0xf]
    %v255 = vld [vmem:[#allocation6 + $0x10] sm:$0xf]
    %v256 = vld [vmem:[#allocation6 + $0x14] sm:$0xf]
    %v257 = vld [vmem:[#allocation6 + $0x18] sm:$0xf]
    %v258 = vld [vmem:[#allocation6 + $0x1c] sm:$0xf]
    %v259 = vld [vmem:[#allocation6 + $0x20] sm:$0xf]
    %v260 = vld [vmem:[#allocation6 + $0x24] sm:$0xf]
    %v261 = vld [vmem:[#allocation6 + $0x28] sm:$0xf]
    %v262 = vld [vmem:[#allocation6 + $0x2c] sm:$0xf]
    %v263 = vld [vmem:[#allocation6 + $0x30] sm:$0xf]
    %v264 = vld [vmem:[#allocation6 + $0x34] sm:$0xf]
    %v265 = vld [vmem:[#allocation6 + $0x38] sm:$0xf]
    %v266 = vld [vmem:[#allocation6 + $0x3c] sm:$0xf]
    %v267 = vld [vmem:[%s6] sm:$0x1]
    %v269 = vperm.slane %v267, 0
    %v287 = vunpack.c.l.b16 %v251
    %v288 = vunpack.c.l.b16 %v252
    %v289 = vunpack.c.l.b16 %v253
    %v290 = vunpack.c.l.b16 %v254
    %v291 = vunpack.c.l.b16 %v255
    %v292 = vunpack.c.l.b16 %v256
    %v293 = vunpack.c.l.b16 %v257
    %v294 = vunpack.c.l.b16 %v258
    %v295 = vunpack.c.l.b16 %v259
    %v296 = vunpack.c.l.b16 %v260
    %v297 = vunpack.c.l.b16 %v261
    %v298 = vunpack.c.l.b16 %v262
    %v299 = vunpack.c.l.b16 %v263
    %v300 = vunpack.c.l.b16 %v264
    %v301 = vunpack.c.l.b16 %v265
    %v302 = vunpack.c.l.b16 %v266
    %v303 = vpack.c.b16 %v288, %v287
    %v304 = vpack.c.b16 %v290, %v289
    %v305 = vpack.c.b16 %v292, %v291
    %v306 = vpack.c.b16 %v294, %v293
    %v307 = vpack.c.b16 %v296, %v295
    %v308 = vpack.c.b16 %v298, %v297
    %v309 = vpack.c.b16 %v300, %v299
    %v310 = vpack.c.b16 %v302, %v301
    %319 = vmatpush.bf16.msra.mxu0 %v310
    %320 = vmatpush.bf16.msra.mxu0 %v309
    %321 = vmatpush.bf16.msra.mxu0 %v308
    %322 = vmatpush.bf16.msra.mxu0 %v307
    %323 = vmatpush.bf16.msra.mxu0 %v306
    %324 = vmatpush.bf16.msra.mxu0 %v305
    %325 = vmatpush.bf16.msra.mxu0 %v304
    %326 = vmatpush.bf16.msra.mxu0 %v303
    %327 = vmatmul.bf16.gmra.mxu0 %v250
    %v328 = vpop.f32.mrf.mxu0
    %v329 = vadd.f32 %v269, %v328
    %v330 = vpop.f32.mrf.mxu0
    %v331 = vadd.f32 %v269, %v330
    %332 = vdwg.mxu0
    %v333 = vsub.f32 0.0, %v329
    %v334 = vsub.f32 0.0, %v331
    %v335 = vmul.f32 %v333, 1.442695
    %v336 = vpow.pop %v335
    %v337 = vmul.f32 %v334, 1.442695
    %v338 = vpow.pop %v337
    %v339 = vadd.f32 %v336, 1.0
    %v340 = vadd.f32 %v338, 1.0
    %v341 = vrcp.pop %v339
    %v342 = vrcp.pop %v340
    %343 = vst [vmem:[%s7] sm:$0xff] %v341
    %344 = vst [vmem:[%s7 + $0x8] sm:$0xff] %v342
    // Predicated region
    $region42: #{_fc_forward_packed.1} parent=1 // pred_check
      _
    $region43: #{_fc_forward_packed.1} parent=1 // pred_check_branch
      %346 = sbr.rel (0) target = $region45
    $region44: #{_fc_forward_packed.1} parent=1 // pred_region
      _
    $region45: #{_fc_forward_packed.1} parent=1 // pred_fallthru
      _
    // Predicated region
    $region46: #{_fc_forward_packed.1} parent=1 // pred_check
      _
    $region47: #{_fc_forward_packed.1} parent=1 // pred_check_branch
      %348 = sbr.rel (0) target = $region49
    $region48: #{_fc_forward_packed.1} parent=1 // pred_region
      _
    $region49: #{_fc_forward_packed.1} parent=1 // pred_fallthru
      _
    %349 = vsyncpa [#allocation3], 1
    %350 = vsyncpa [#allocation5], 1

</llo_original>
